<compile_context>
chip_gen: v5e
topology: v5e:2x2
jax: 0.10.0
libtpu: 0.0.40
codegen_flags: <defaults>
</compile_context>

<pallas_src>
import jax
import jax.numpy as jnp
from jax.experimental import pallas as pl
from jax.experimental.pallas import tpu as pltpu

_LANE = 128


def _round_up(x, m):
    return ((x + m - 1) // m) * m


# --------------------------------------------------------------------------
# Kernels
# --------------------------------------------------------------------------
def _linear_bias_kernel(x_ref, w_ref, b_ref, o_ref):
    """Un-tiled-K step: y_tile = x_tile @ W_tile + b (no accumulator scratch)."""
    acc = jnp.dot(
        x_ref[...].astype(jnp.bfloat16),   # no-op if x is already bf16
        w_ref[...],
        preferred_element_type=jnp.float32,
    )
    o_ref[...] = (acc + b_ref[...]).astype(o_ref.dtype)


def _linear_bias_acc_kernel(x_ref, w_ref, b_ref, o_ref, acc_ref):
    """K-tiled step with f32 VMEM accumulator (zero @ k==0, store @ last k)."""
    k = pl.program_id(2)

    @pl.when(k == 0)
    def _init():
        acc_ref[...] = jnp.zeros_like(acc_ref)

    acc_ref[...] += jnp.dot(
        x_ref[...].astype(jnp.bfloat16),
        w_ref[...],
        preferred_element_type=jnp.float32,
    )

    @pl.when(k == pl.num_programs(2) - 1)
    def _store():
        o_ref[...] = (acc_ref[...] + b_ref[...]).astype(o_ref.dtype)


# --------------------------------------------------------------------------
# Tiling heuristics
# --------------------------------------------------------------------------
def _tpu_hw_params():
    """(vmem_capacity_bytes, tensorcores_per_chip) with safe fallbacks."""
    vmem_cap = 64 * 2**20       # conservative default (v7x per-TC VMEM)
    num_cores = 1
    try:
        info = pltpu.get_tpu_info()
        vmem_cap = int(getattr(info, "vmem_capacity_bytes", vmem_cap))
    except Exception:
        pass
    try:
        kind = jax.devices()[0].device_kind.lower()
        if "v7" in kind:
            num_cores = 2       # megacore: 2 TCs per chip
    except Exception:
        pass
    return vmem_cap, num_cores


def _choose_tn(d_out, cap=2048):
    """N tile: full d_out when moderate, else a 128-multiple divisor <= cap."""
    if d_out <= cap:
        return d_out
    for cand in (2048, 1792, 1536, 1280, 1024, 768, 512, 384, 256, 128):
        if cand <= cap and d_out % cand == 0:
            return cand
    return cap  # ragged last N block (masked); rare for hyper-connection dims


def _choose_tk(d_in, tn, w_budget):
    """Prefer un-tiled K (weight fetched once); else largest 128-mult divisor."""
    if 2 * d_in * tn * 2 <= w_budget:           # bf16 weight, double-buffered
        return d_in
    max_tk = max(_LANE, (w_budget // (2 * tn * 2)) // _LANE * _LANE)
    tk = max_tk
    while tk > _LANE and d_in % tk != 0:
        tk -= _LANE
    if d_in % tk != 0:
        # No 128-multiple divisor: keep K un-tiled (never produce a ragged K
        # tile -- garbage K padding would contaminate valid outputs).
        tk = d_in
    return tk


def _choose_tiles(m, d_in, d_out, x_bytes, out_bytes, budget, num_cores):
    tn = _choose_tn(d_out)
    tk = _choose_tk(d_in, tn, budget // 2)
    k_tiles = d_in // tk if d_in % tk == 0 else 1

    align = 16 if x_bytes == 2 else 8
    tm_cap = 1024 if budget >= 64 * 2**20 else 512

    if m <= align:
        tm = m                                   # full-extent row block
    else:
        tm = min(tm_cap, _round_up(m, align))
        if num_cores > 1:
            # Only split rows when there really are multiple TensorCores.
            tm = min(tm, _round_up(pl.cdiv(m, num_cores), align))
        if tm > _LANE:
            tm = _round_up(tm, _LANE)            # MXU-friendly (no odd tiles)
        tm = min(tm, _round_up(m, align))

    def footprint(tm_):
        fp = (2 * tm_ * tk * x_bytes             # x tiles (double-buffered)
              + 2 * tk * tn * 2                  # bf16 weight tiles
              + 2 * tm_ * tn * out_bytes         # output tiles
              + 2 * tn * 4)                      # bias
        if k_tiles > 1:
            fp += tm_ * tn * 4                   # f32 accumulator scratch
        return fp

    while tm > align and footprint(tm) > budget:
        tm = max(align, _round_up(tm // 2, align))
    return tm, tn, tk, k_tiles, footprint(tm)


# --------------------------------------------------------------------------
# Host wrapper
# --------------------------------------------------------------------------
def _linear_pallas(x2d, w, b):
    """y = x2d @ w + b.  w is [d_in, d_out] bf16, b is [d_out] f32."""
    m, d_in = x2d.shape
    d_out = w.shape[1]
    out_dtype = x2d.dtype
    x_bytes = jnp.dtype(x2d.dtype).itemsize
    out_bytes = jnp.dtype(out_dtype).itemsize

    # Lane-sparse output (< 128): masked vst.msk stores dominate wall clock;
    # such configs are tiny -- defer to XLA.
    if d_out < _LANE:
        return (jnp.dot(x2d.astype(jnp.bfloat16), w,
                        preferred_element_type=jnp.float32)
                + b.astype(jnp.float32)).astype(out_dtype)

    vmem_cap, num_cores = _tpu_hw_params()
    budget = max(32 * 2**20, int(vmem_cap * 0.65))   # ~83 MiB v5e/v6e, ~41 MiB v7x

    tm, tn, tk, k_tiles, fp = _choose_tiles(
        m, d_in, d_out, x_bytes, out_bytes, budget, num_cores)
    m_tiles = pl.cdiv(m, tm)
    n_tiles = pl.cdiv(d_out, tn)

    b2d = b.reshape(1, d_out).astype(jnp.float32)

    # HBM traffic: W re-streamed once per row tile whenever the inner (n, k)
    # block indices cycle; x re-streamed per N tile only when K is tiled.
    w_passes = 1 if (n_tiles == 1 and k_tiles == 1) else m_tiles
    x_passes = n_tiles if k_tiles > 1 else 1
    cost = pl.CostEstimate(
        flops=2 * m * d_in * d_out,
        transcendentals=0,
        bytes_accessed=(x_passes * m * d_in * x_bytes
                        + w_passes * d_in * d_out * 2
                        + d_out * 4
                        + m * d_out * out_bytes),
    )

    vmem_limit = int(min(max(vmem_cap - 4 * 2**20, 32 * 2**20),
                         max(32 * 2**20, fp + 8 * 2**20)))

    if k_tiles == 1:
        # Resident-K path: W fetched once (block index constant across the
        # grid when n_tiles == 1), no accumulator scratch, direct store.
        grid = (m_tiles, n_tiles)
        in_specs = [
            pl.BlockSpec((tm, d_in), lambda i, n: (i, 0)),   # x row band
            pl.BlockSpec((d_in, tn), lambda i, n: (0, n)),   # weight N tile
            pl.BlockSpec((1, tn), lambda i, n: (0, n)),      # bias
        ]
        out_specs = pl.BlockSpec((tm, tn), lambda i, n: (i, n))
        scratch = []
        kernel = _linear_bias_kernel
        dims = ("parallel", "parallel")
    else:
        grid = (m_tiles, n_tiles, k_tiles)
        in_specs = [
            pl.BlockSpec((tm, tk), lambda i, n, k: (i, k)),
            pl.BlockSpec((tk, tn), lambda i, n, k: (k, n)),
            pl.BlockSpec((1, tn), lambda i, n, k: (0, n)),
        ]
        out_specs = pl.BlockSpec((tm, tn), lambda i, n, k: (i, n))
        scratch = [pltpu.VMEM((tm, tn), jnp.float32)]
        kernel = _linear_bias_acc_kernel
        dims = ("parallel", "parallel", "arbitrary")

    return pl.pallas_call(
        kernel,
        out_shape=jax.ShapeDtypeStruct((m, d_out), out_dtype),
        grid_spec=pltpu.PrefetchScalarGridSpec(
            num_scalar_prefetch=0,
            grid=grid,
            in_specs=in_specs,
            out_specs=out_specs,
            scratch_shapes=scratch,
        ),
        compiler_params=pltpu.CompilerParams(
            dimension_semantics=dims,
            vmem_limit_bytes=vmem_limit,
        ),
        cost_estimate=cost,
    )(x2d, w, b2d)


class ReduceStreams:
    """JAX/Pallas port of the PyTorch ReduceStreams module."""

    def __init__(self, dim: int, num_streams: int, key=None):
        self.dim = dim
        self.num_streams = num_streams
        in_features = dim * num_streams
        if key is None:
            key = jax.random.PRNGKey(0)
        kw, kb = jax.random.split(key)
        # nn.Linear default init (uniform +-1/sqrt(fan_in)); weight kept as
        # [in, out] and stored in bf16 for the MXU (halves W HBM traffic,
        # 2x MXU throughput); bias stays f32.
        bound = 1.0 / (in_features ** 0.5)
        self.weight = jax.random.uniform(
            kw, (in_features, dim), dtype=jnp.float32,
            minval=-bound, maxval=bound).astype(jnp.bfloat16)
        self.bias = jax.random.uniform(
            kb, (dim,), dtype=jnp.float32, minval=-bound, maxval=bound)

    def __call__(self, x):
        batch, seq_len, input_dim = x.shape
        expected_dim = self.dim * self.num_streams

        # Shape-fixup glue (matches the PyTorch forward's warning paths).
        if input_dim != expected_dim:
            if input_dim > expected_dim:
                x = x[:, :, :expected_dim]
            else:
                pad = jnp.zeros(
                    (batch, seq_len, expected_dim - input_dim), dtype=x.dtype)
                x = jnp.concatenate([x, pad], axis=-1)

        # TODO(synk): accept bf16 x from the producer (fused downcast) to halve
        # x HBM traffic; the in-kernel astype is the fallback for f32 inputs.
        x2d = x.reshape(batch * seq_len, expected_dim)
        out2d = _linear_pallas(x2d, self.weight, self.bias)
        return out2d.reshape(batch, seq_len, self.dim)


if __name__ == "__main__":
    # Small shapes consistent with the forward: [batch, seq_len, dim*num_streams].
    # dim=128 keeps the output lane-dense so the Pallas path is exercised.
    batch, seq_len, dim, num_streams = 2, 8, 128, 4

    key = jax.random.PRNGKey(0)
    kx, kp = jax.random.split(key)
    x = jax.random.normal(
        kx, (batch, seq_len, dim * num_streams), dtype=jnp.float32)

    module = ReduceStreams(dim, num_streams, key=kp)

    out = jax.block_until_ready(module(x))

    # Reference: same bf16-operand / f32-accumulate math in plain JAX.
    x2d = x.reshape(batch * seq_len, -1)
    ref = (jnp.dot(x2d.astype(jnp.bfloat16), module.weight,
                   preferred_element_type=jnp.float32)
           + module.bias).astype(x.dtype).reshape(batch, seq_len, dim)

    assert out.shape == (batch, seq_len, dim)
    err = float(jnp.max(jnp.abs(out - ref)))
    assert err < 1e-2, err

    print("KERNEL_OK")
</pallas_src>

<mosaic_0001>
module attributes {stable_mosaic.version = 11 : i64} {
  func.func @_linear_bias_kernel(%arg0: i32, %arg1: i32, %arg2: memref<16x512xf32, #tpu.memory_space<vmem>>, %arg3: memref<512x128xbf16, #tpu.memory_space<vmem>>, %arg4: memref<1x128xf32, #tpu.memory_space<vmem>>, %arg5: memref<16x128xf32, #tpu.memory_space<vmem>>) attributes {dimension_semantics = [#tpu.dimension_semantics<parallel>, #tpu.dimension_semantics<parallel>], iteration_bounds = array<i64: 1, 1>, scalar_prefetch = 0 : i64, scratch_operands = 0 : i64, tpu.core_type = #tpu.core_type<tc>, window_params = [{transform_indices = @transform_0, window_bounds = array<i64: 16, 512>}, {transform_indices = @transform_1, window_bounds = array<i64: 512, 128>}, {transform_indices = @transform_2, window_bounds = array<i64: 1, 128>}, {transform_indices = @transform_3, window_bounds = array<i64: 16, 128>}]} {
    %c0 = arith.constant 0 : index
    %c0_0 = arith.constant 0 : index
    %0 = vector.load %arg2[%c0, %c0_0] : memref<16x512xf32, #tpu.memory_space<vmem>>, vector<16x512xf32>
    %1 = arith.truncf %0 : vector<16x512xf32> to vector<16x512xbf16>
    %c0_1 = arith.constant 0 : index
    %c0_2 = arith.constant 0 : index
    %2 = vector.load %arg3[%c0_1, %c0_2] : memref<512x128xbf16, #tpu.memory_space<vmem>>, vector<512x128xbf16>
    %cst = arith.constant dense<0.000000e+00> : vector<16x128xf32>
    %3 = tpu.matmul %1, %2, %cst {dimension_numbers = #tpu.dot_dimension_numbers<[1], [0], [0], [1], [0, 0, 1, 1], [], []>} : vector<16x512xbf16>, vector<512x128xbf16>, vector<16x128xf32> -> vector<16x128xf32>
    %c0_3 = arith.constant 0 : index
    %c0_4 = arith.constant 0 : index
    %4 = vector.load %arg4[%c0_3, %c0_4] : memref<1x128xf32, #tpu.memory_space<vmem>>, vector<1x128xf32>
    %5 = vector.broadcast %4 : vector<1x128xf32> to vector<16x128xf32>
    %6 = arith.addf %3, %5 : vector<16x128xf32>
    %c0_5 = arith.constant 0 : index
    %c0_6 = arith.constant 0 : index
    %7 = vector.load %arg5[%c0_5, %c0_6] : memref<16x128xf32, #tpu.memory_space<vmem>>, vector<16x128xf32>
    tpu.vector_store %arg5[%c0_5, %c0_6], %6 {strides = array<i32>} : memref<16x128xf32, #tpu.memory_space<vmem>>, vector<16x128xf32>,
    return
  }
  func.func @transform_0(%arg0: i32, %arg1: i32) -> (i32, i32) {
    %c0_i32 = arith.constant 0 : i32
    %c0_i32_0 = arith.constant 0 : i32
    return %arg0, %c0_i32 : i32, i32
  }
  func.func @transform_1(%arg0: i32, %arg1: i32) -> (i32, i32) {
    %c0_i32 = arith.constant 0 : i32
    %c0_i32_0 = arith.constant 0 : i32
    return %c0_i32, %arg1 : i32, i32
  }
  func.func @transform_2(%arg0: i32, %arg1: i32) -> (i32, i32) {
    %c0_i32 = arith.constant 0 : i32
    %c0_i32_0 = arith.constant 0 : i32
    return %c0_i32, %arg1 : i32, i32
  }
  func.func @transform_3(%arg0: i32, %arg1: i32) -> (i32, i32) {
    %c0_i32 = arith.constant 0 : i32
    return %arg0, %arg1 : i32, i32
  }
}

</mosaic_0001>

<llo_original>
// kernel: tpu_custom_call.1
$region0: #{tpu_custom_call.1}
  #allocation0 [shape = 'u32[]', space=smem, size = 0x4, offset = 0x4, fixed_abs, tag = 'smem constant byte address 0x4 - core index']
  #allocation1 [shape = 'u32[72,128]{1,0:T(1,128)}', space=vmem, size = 0x9000, scoped, tag = 'internal scratch']
  %s0 = inlined_call_operand.hbm [shape: f32[16,512], index: 0, kind: input, shape index: {}]
  %s1 = inlined_call_operand.hbm [shape: bf16[512,128], index: 1, kind: input, shape index: {}]
  %s2 = inlined_call_operand.vmem [shape: f32[1,128], index: 2, kind: input, shape index: {}]
  %s3 = inlined_call_operand.hbm [shape: f32[16,128], index: 3, kind: output, shape index: {}]
  %s4 = sld [smem:[#allocation0]]
  $region30: #{tpu_custom_call.1} parent=0
    _
  %s6 = ssub.s32 1, %s4
  %s7 = scalar_select 0, %s6, %s4
  $region1: #{tpu_custom_call.1} parent=0
    #allocation2 [shape = 'u8[32768]{0}', space=vmem, size = 0x8000, scoped, tag = 'input window, operand 0, single buffered']
    #allocation3 [shape = 's32[1]{0}', space=sflag, size = 0x4, scoped, tag = 'scoped memory for tpu_custom_call.1']
    #allocation4 [shape = 's32[1]{0}', space=sflag, size = 0x4, scoped, tag = 'scoped memory for tpu_custom_call.1']
    #allocation5 [shape = 'u8[131072]{0}', space=vmem, size = 0x20000, scoped, tag = 'input window, operand 1, single buffered']
    #allocation6 [shape = 's32[1]{0}', space=sflag, size = 0x4, scoped, tag = 'scoped memory for tpu_custom_call.1']
    #allocation7 [shape = 'u8[8192]{0}', space=vmem, size = 0x2000, scoped, tag = 'output window, operand 0, single buffered']
    %8 = vsyncpa [#allocation3], 0
    %9 = vsyncpa [#allocation6], 0
    %10 = vsyncpa [#allocation4], 0
    // Predicated region
    $region2: #{tpu_custom_call.1} parent=1 // pred_check
      _
    $region3: #{tpu_custom_call.1} parent=1 // pred_check_branch
      %12 = sbr.rel (0) target = $region5
    $region4: #{tpu_custom_call.1} parent=1 // pred_region
      %14 = vsyncadd [#allocation3], 0
      %s15 = sshll.u32 %s0, 4
      %s16 = int_to_ptr.hbm [resolvable:$true] %s15
      %s17 = sshll.u32 [#allocation2], 4
      %s18 = int_to_ptr.vmem [resolvable:$true] %s17
      %23 = dma.hbm_to_vmem [thread:$0]  %s16, 1024, %s18, [#allocation3], 512, 512, 32
    $region5: #{tpu_custom_call.1} parent=1 // pred_fallthru
      _
    // Predicated region
    $region6: #{tpu_custom_call.1} parent=1 // pred_check
      _
    $region7: #{tpu_custom_call.1} parent=1 // pred_check_branch
      %25 = sbr.rel (0) target = $region9
    $region8: #{tpu_custom_call.1} parent=1 // pred_region
      %27 = vsyncadd [#allocation6], 0
      %s28 = sshll.u32 %s1, 4
      %s29 = int_to_ptr.hbm [resolvable:$true] %s28
      %s30 = sshll.u32 [#allocation5], 4
      %s31 = int_to_ptr.vmem [resolvable:$true] %s30
      %36 = dma.hbm_to_vmem [thread:$0]  %s29, 4096, %s31, [#allocation6], 64, 64, 4
    $region9: #{tpu_custom_call.1} parent=1 // pred_fallthru
      _
    // Predicated region
    $region10: #{tpu_custom_call.1} parent=1 // pred_check
      _
    $region11: #{tpu_custom_call.1} parent=1 // pred_check_branch
      %38 = sbr.rel (0) target = $region13
    $region12: #{tpu_custom_call.1} parent=1 // pred_region
      _
    $region13: #{tpu_custom_call.1} parent=1 // pred_fallthru
      _
    // Predicated region
    $region14: #{tpu_custom_call.1} parent=1 // pred_check
      _
    $region15: #{tpu_custom_call.1} parent=1 // pred_check_branch
      %40 = sbr.rel (0) target = $region17
    $region16: #{tpu_custom_call.1} parent=1 // pred_region
      %42 = dma.done [#allocation3], 1024
    $region17: #{tpu_custom_call.1} parent=1 // pred_fallthru
      _
    // Predicated region
    $region18: #{tpu_custom_call.1} parent=1 // pred_check
      _
    $region19: #{tpu_custom_call.1} parent=1 // pred_check_branch
      %44 = sbr.rel (0) target = $region21
    $region20: #{tpu_custom_call.1} parent=1 // pred_region
      %46 = dma.done [#allocation6], 4096
    $region21: #{tpu_custom_call.1} parent=1 // pred_fallthru
      _
    %v47 = vld [vmem:[#allocation2] sm:$0xff]
    %v48 = vld [vmem:[#allocation2 + $0x8] sm:$0xff]
    %v49 = vld [vmem:[#allocation2 + $0x10] sm:$0xff]
    %v50 = vld [vmem:[#allocation2 + $0x18] sm:$0xff]
    %v51 = vld [vmem:[#allocation2 + $0x20] sm:$0xff]
    %v52 = vld [vmem:[#allocation2 + $0x28] sm:$0xff]
    %v53 = vld [vmem:[#allocation2 + $0x30] sm:$0xff]
    %v54 = vld [vmem:[#allocation2 + $0x38] sm:$0xff]
    %v55 = vpack.c.bf16 %v51, %v47
    %v56 = vpack.c.bf16 %v52, %v48
    %v57 = vpack.c.bf16 %v53, %v49
    %v58 = vpack.c.bf16 %v54, %v50
    %v59 = vld [vmem:[#allocation5] sm:$0xf]
    %v60 = vld [vmem:[#allocation5 + $0x4] sm:$0xf]
    %v61 = vld [vmem:[#allocation5 + $0x8] sm:$0xf]
    %v62 = vld [vmem:[#allocation5 + $0xc] sm:$0xf]
    %v63 = vld [vmem:[#allocation5 + $0x10] sm:$0xf]
    %v64 = vld [vmem:[#allocation5 + $0x14] sm:$0xf]
    %v65 = vld [vmem:[#allocation5 + $0x18] sm:$0xf]
    %v66 = vld [vmem:[#allocation5 + $0x1c] sm:$0xf]
    %v67 = vld [vmem:[#allocation5 + $0x20] sm:$0xf]
    %v68 = vld [vmem:[#allocation5 + $0x24] sm:$0xf]
    %v69 = vld [vmem:[#allocation5 + $0x28] sm:$0xf]
    %v70 = vld [vmem:[#allocation5 + $0x2c] sm:$0xf]
    %v71 = vld [vmem:[#allocation5 + $0x30] sm:$0xf]
    %v72 = vld [vmem:[#allocation5 + $0x34] sm:$0xf]
    %v73 = vld [vmem:[#allocation5 + $0x38] sm:$0xf]
    %v74 = vld [vmem:[#allocation5 + $0x3c] sm:$0xf]
    %v75 = vld [vmem:[#allocation5 + $0x40] sm:$0xf]
    %v76 = vld [vmem:[#allocation5 + $0x44] sm:$0xf]
    %v77 = vld [vmem:[#allocation5 + $0x48] sm:$0xf]
    %v78 = vld [vmem:[#allocation5 + $0x4c] sm:$0xf]
    %v79 = vld [vmem:[#allocation5 + $0x50] sm:$0xf]
    %v80 = vld [vmem:[#allocation5 + $0x54] sm:$0xf]
    %v81 = vld [vmem:[#allocation5 + $0x58] sm:$0xf]
    %v82 = vld [vmem:[#allocation5 + $0x5c] sm:$0xf]
    %v83 = vld [vmem:[#allocation5 + $0x60] sm:$0xf]
    %v84 = vld [vmem:[#allocation5 + $0x64] sm:$0xf]
    %v85 = vld [vmem:[#allocation5 + $0x68] sm:$0xf]
    %v86 = vld [vmem:[#allocation5 + $0x6c] sm:$0xf]
    %v87 = vld [vmem:[#allocation5 + $0x70] sm:$0xf]
    %v88 = vld [vmem:[#allocation5 + $0x74] sm:$0xf]
    %v89 = vld [vmem:[#allocation5 + $0x78] sm:$0xf]
    %v90 = vld [vmem:[#allocation5 + $0x7c] sm:$0xf]
    %v91 = vld [vmem:[#allocation5 + $0x80] sm:$0xf]
    %v92 = vld [vmem:[#allocation5 + $0x84] sm:$0xf]
    %v93 = vld [vmem:[#allocation5 + $0x88] sm:$0xf]
    %v94 = vld [vmem:[#allocation5 + $0x8c] sm:$0xf]
    %v95 = vld [vmem:[#allocation5 + $0x90] sm:$0xf]
    %v96 = vld [vmem:[#allocation5 + $0x94] sm:$0xf]
    %v97 = vld [vmem:[#allocation5 + $0x98] sm:$0xf]
    %v98 = vld [vmem:[#allocation5 + $0x9c] sm:$0xf]
    %v99 = vld [vmem:[#allocation5 + $0xa0] sm:$0xf]
    %v100 = vld [vmem:[#allocation5 + $0xa4] sm:$0xf]
    %v101 = vld [vmem:[#allocation5 + $0xa8] sm:$0xf]
    %v102 = vld [vmem:[#allocation5 + $0xac] sm:$0xf]
    %v103 = vld [vmem:[#allocation5 + $0xb0] sm:$0xf]
    %v104 = vld [vmem:[#allocation5 + $0xb4] sm:$0xf]
    %v105 = vld [vmem:[#allocation5 + $0xb8] sm:$0xf]
    %v106 = vld [vmem:[#allocation5 + $0xbc] sm:$0xf]
    %v107 = vld [vmem:[#allocation5 + $0xc0] sm:$0xf]
    %v108 = vld [vmem:[#allocation5 + $0xc4] sm:$0xf]
    %v109 = vld [vmem:[#allocation5 + $0xc8] sm:$0xf]
    %v110 = vld [vmem:[#allocation5 + $0xcc] sm:$0xf]
    %v111 = vld [vmem:[#allocation5 + $0xd0] sm:$0xf]
    %v112 = vld [vmem:[#allocation5 + $0xd4] sm:$0xf]
    %v113 = vld [vmem:[#allocation5 + $0xd8] sm:$0xf]
    %v114 = vld [vmem:[#allocation5 + $0xdc] sm:$0xf]
    %v115 = vld [vmem:[#allocation5 + $0xe0] sm:$0xf]
    %v116 = vld [vmem:[#allocation5 + $0xe4] sm:$0xf]
    %v117 = vld [vmem:[#allocation5 + $0xe8] sm:$0xf]
    %v118 = vld [vmem:[#allocation5 + $0xec] sm:$0xf]
    %v119 = vld [vmem:[#allocation5 + $0xf0] sm:$0xf]
    %v120 = vld [vmem:[#allocation5 + $0xf4] sm:$0xf]
    %v121 = vld [vmem:[#allocation5 + $0xf8] sm:$0xf]
    %v122 = vld [vmem:[#allocation5 + $0xfc] sm:$0xf]
    %v123 = vld [vmem:[%s2] sm:$0x1]
    %v125 = vperm.slane %v123, 0
    %v191 = vunpack.c.l.b16 %v59
    %v192 = vunpack.c.l.b16 %v60
    %v193 = vunpack.c.l.b16 %v61
    %v194 = vunpack.c.l.b16 %v62
    %v195 = vunpack.c.l.b16 %v63
    %v196 = vunpack.c.l.b16 %v64
    %v197 = vunpack.c.l.b16 %v65
    %v198 = vunpack.c.l.b16 %v66
    %v199 = vunpack.c.l.b16 %v67
    %v200 = vunpack.c.l.b16 %v68
    %v201 = vunpack.c.l.b16 %v69
    %v202 = vunpack.c.l.b16 %v70
    %v203 = vunpack.c.l.b16 %v71
    %v204 = vunpack.c.l.b16 %v72
    %v205 = vunpack.c.l.b16 %v73
    %v206 = vunpack.c.l.b16 %v74
    %v207 = vunpack.c.l.b16 %v75
    %v208 = vunpack.c.l.b16 %v76
    %v209 = vunpack.c.l.b16 %v77
    %v210 = vunpack.c.l.b16 %v78
    %v211 = vunpack.c.l.b16 %v79
    %v212 = vunpack.c.l.b16 %v80
    %v213 = vunpack.c.l.b16 %v81
    %v214 = vunpack.c.l.b16 %v82
    %v215 = vunpack.c.l.b16 %v83
    %v216 = vunpack.c.l.b16 %v84
    %v217 = vunpack.c.l.b16 %v85
    %v218 = vunpack.c.l.b16 %v86
    %v219 = vunpack.c.l.b16 %v87
    %v220 = vunpack.c.l.b16 %v88
    %v221 = vunpack.c.l.b16 %v89
    %v222 = vunpack.c.l.b16 %v90
    %v223 = vunpack.c.l.b16 %v91
    %v224 = vunpack.c.l.b16 %v92
    %v225 = vunpack.c.l.b16 %v93
    %v226 = vunpack.c.l.b16 %v94
    %v227 = vunpack.c.l.b16 %v95
    %v228 = vunpack.c.l.b16 %v96
    %v229 = vunpack.c.l.b16 %v97
    %v230 = vunpack.c.l.b16 %v98
    %v231 = vunpack.c.l.b16 %v99
    %v232 = vunpack.c.l.b16 %v100
    %v233 = vunpack.c.l.b16 %v101
    %v234 = vunpack.c.l.b16 %v102
    %v235 = vunpack.c.l.b16 %v103
    %v236 = vunpack.c.l.b16 %v104
    %v237 = vunpack.c.l.b16 %v105
    %v238 = vunpack.c.l.b16 %v106
    %v239 = vunpack.c.l.b16 %v107
    %v240 = vunpack.c.l.b16 %v108
    %v241 = vunpack.c.l.b16 %v109
    %v242 = vunpack.c.l.b16 %v110
    %v243 = vunpack.c.l.b16 %v111
    %v244 = vunpack.c.l.b16 %v112
    %v245 = vunpack.c.l.b16 %v113
    %v246 = vunpack.c.l.b16 %v114
    %v247 = vunpack.c.l.b16 %v115
    %v248 = vunpack.c.l.b16 %v116
    %v249 = vunpack.c.l.b16 %v117
    %v250 = vunpack.c.l.b16 %v118
    %v251 = vunpack.c.l.b16 %v119
    %v252 = vunpack.c.l.b16 %v120
    %v253 = vunpack.c.l.b16 %v121
    %v254 = vunpack.c.l.b16 %v122
    %v255 = vpack.c.b16 %v192, %v191
    %v256 = vpack.c.b16 %v194, %v193
    %v257 = vpack.c.b16 %v196, %v195
    %v258 = vpack.c.b16 %v198, %v197
    %v259 = vpack.c.b16 %v200, %v199
    %v260 = vpack.c.b16 %v202, %v201
    %v261 = vpack.c.b16 %v204, %v203
    %v262 = vpack.c.b16 %v206, %v205
    %v263 = vpack.c.b16 %v208, %v207
    %v264 = vpack.c.b16 %v210, %v209
    %v265 = vpack.c.b16 %v212, %v211
    %v266 = vpack.c.b16 %v214, %v213
    %v267 = vpack.c.b16 %v216, %v215
    %v268 = vpack.c.b16 %v218, %v217
    %v269 = vpack.c.b16 %v220, %v219
    %v270 = vpack.c.b16 %v222, %v221
    %v271 = vpack.c.b16 %v224, %v223
    %v272 = vpack.c.b16 %v226, %v225
    %v273 = vpack.c.b16 %v228, %v227
    %v274 = vpack.c.b16 %v230, %v229
    %v275 = vpack.c.b16 %v232, %v231
    %v276 = vpack.c.b16 %v234, %v233
    %v277 = vpack.c.b16 %v236, %v235
    %v278 = vpack.c.b16 %v238, %v237
    %v279 = vpack.c.b16 %v240, %v239
    %v280 = vpack.c.b16 %v242, %v241
    %v281 = vpack.c.b16 %v244, %v243
    %v282 = vpack.c.b16 %v246, %v245
    %v283 = vpack.c.b16 %v248, %v247
    %v284 = vpack.c.b16 %v250, %v249
    %v285 = vpack.c.b16 %v252, %v251
    %v286 = vpack.c.b16 %v254, %v253
    %319 = vmatpush.bf16.msra.mxu0 %v262
    %320 = vmatpush.bf16.msra.mxu0 %v261
    %321 = vmatpush.bf16.msra.mxu0 %v260
    %322 = vmatpush.bf16.msra.mxu0 %v259
    %323 = vmatpush.bf16.msra.mxu0 %v258
    %324 = vmatpush.bf16.msra.mxu0 %v257
    %325 = vmatpush.bf16.msra.mxu0 %v256
    %326 = vmatpush.bf16.msra.mxu0 %v255
    %327 = vmatmul.bf16.gmra.mxu0 %v55
    %v328 = vpop.f32.mrf.mxu0
    %v329 = vadd.f32 %v125, %v328
    %v330 = vpop.f32.mrf.mxu0
    %v331 = vadd.f32 %v125, %v330
    %332 = vdwg.mxu0
    %333 = vmatpush.bf16.msra.mxu0 %v270
    %334 = vmatpush.bf16.msra.mxu0 %v269
    %335 = vmatpush.bf16.msra.mxu0 %v268
    %336 = vmatpush.bf16.msra.mxu0 %v267
    %337 = vmatpush.bf16.msra.mxu0 %v266
    %338 = vmatpush.bf16.msra.mxu0 %v265
    %339 = vmatpush.bf16.msra.mxu0 %v264
    %340 = vmatpush.bf16.msra.mxu0 %v263
    %341 = vmatmul.bf16.gmra.mxu0 %v56
    %v342 = vpop.f32.mrf.mxu0
    %v343 = vadd.f32 %v329, %v342
    %v344 = vpop.f32.mrf.mxu0
    %v345 = vadd.f32 %v331, %v344
    %346 = vdwg.mxu0
    %347 = vmatpush.bf16.msra.mxu0 %v278
    %348 = vmatpush.bf16.msra.mxu0 %v277
    %349 = vmatpush.bf16.msra.mxu0 %v276
    %350 = vmatpush.bf16.msra.mxu0 %v275
    %351 = vmatpush.bf16.msra.mxu0 %v274
    %352 = vmatpush.bf16.msra.mxu0 %v273
    %353 = vmatpush.bf16.msra.mxu0 %v272
    %354 = vmatpush.bf16.msra.mxu0 %v271
    %355 = vmatmul.bf16.gmra.mxu0 %v57
    %v356 = vpop.f32.mrf.mxu0
    %v357 = vadd.f32 %v343, %v356
    %v358 = vpop.f32.mrf.mxu0
    %v359 = vadd.f32 %v345, %v358
    %360 = vdwg.mxu0
    %361 = vmatpush.bf16.msra.mxu0 %v286
    %362 = vmatpush.bf16.msra.mxu0 %v285
    %363 = vmatpush.bf16.msra.mxu0 %v284
    %364 = vmatpush.bf16.msra.mxu0 %v283
    %365 = vmatpush.bf16.msra.mxu0 %v282
    %366 = vmatpush.bf16.msra.mxu0 %v281
    %367 = vmatpush.bf16.msra.mxu0 %v280
    %368 = vmatpush.bf16.msra.mxu0 %v279
    %369 = vmatmul.bf16.gmra.mxu0 %v58
    %v370 = vpop.f32.mrf.mxu0
    %v371 = vadd.f32 %v357, %v370
    %v372 = vpop.f32.mrf.mxu0
    %v373 = vadd.f32 %v359, %v372
    %374 = vdwg.mxu0
    %375 = vst [vmem:[#allocation7] sm:$0xff] %v371
    %376 = vst [vmem:[#allocation7 + $0x8] sm:$0xff] %v373
    // Predicated region
    $region22: #{tpu_custom_call.1} parent=1 // pred_check
      _
    $region23: #{tpu_custom_call.1} parent=1 // pred_check_branch
      %378 = sbr.rel (0) target = $region25
    $region24: #{tpu_custom_call.1} parent=1 // pred_region
      %380 = vsyncadd [#allocation4], 0
      %s381 = sshll.u32 [#allocation7], 4
      %s382 = int_to_ptr.vmem [resolvable:$true] %s381
      %s383 = sshll.u32 %s3, 4
      %s384 = int_to_ptr.hbm [resolvable:$true] %s383
      %389 = dma.vmem_to_hbm [thread:$0]  %s382, 256, %s384, [#allocation4], 128, 128, 8
    $region25: #{tpu_custom_call.1} parent=1 // pred_fallthru
      _
    // Predicated region
    $region26: #{tpu_custom_call.1} parent=1 // pred_check
      _
    $region27: #{tpu_custom_call.1} parent=1 // pred_check_branch
      %391 = sbr.rel (0) target = $region29
    $region28: #{tpu_custom_call.1} parent=1 // pred_region
      %393 = dma.done [#allocation4], 256
    $region29: #{tpu_custom_call.1} parent=1 // pred_fallthru
      _
    %394 = vsyncpa [#allocation3], 1
    %395 = vsyncpa [#allocation6], 1
    %396 = vsyncpa [#allocation4], 1

</llo_original>
